<compile_context>
chip_gen: v7x
topology: tpu7x:2x2x1
jax: 0.10.0
libtpu: 0.0.40
codegen_flags: <defaults>
</compile_context>

<pallas_src>
import math

import numpy as np
import jax
import jax.numpy as jnp
from jax import lax
from jax.experimental import pallas as pl
from jax.experimental.pallas import tpu as pltpu  # noqa: F401  (TPU backend)

# ----------------------------- configuration -------------------------------
B = 2          # batch
S = 8          # number of queries (sequence length)
D = 32         # d_model
H = 4          # n_heads
DH = D // H    # head dim
FF = 64        # d_ffn
EPS = 1e-5     # nn.LayerNorm default eps
BS = B * S     # packed rows
HB = H * BS    # head-stacked rows
VW = max(2 * D, FF)   # vector-slab width
NEG = -1e30    # additive mask value for cross-batch attention


# ------------------------------- kernel ------------------------------------
def _decoder_layer_kernel(x_ref, pos_ref, w_qkv_ref, w_o_ref, w_f1_ref, w_f2_ref,
                          vec_ref, mask_ref, out_ref):
    f32 = jnp.float32
    bf16 = jnp.bfloat16

    x = x_ref[...].astype(f32)        # (BS, D)
    pos = pos_ref[...].astype(f32)    # (BS, D)
    Wqkv = w_qkv_ref[...]             # (D, 3D)  bf16  [Wq*s | Wk | Wv]
    Wo = w_o_ref[...]                 # (D, D)   bf16
    Wf1 = w_f1_ref[...]               # (D, FF)  bf16
    Wf2 = w_f2_ref[...]               # (FF, D)  bf16  (pre-transposed lin2)
    V = vec_ref[...]                  # (9, VW)  f32   LN params + biases
    M = mask_ref[...]                 # (2*HB, D) f32  [head_sel ; attn_bias(pad)]

    head_sel = M[:HB, :]              # (HB, D)  0/1 head-column selection
    attn_bias = M[HB:, :BS]           # (HB, BS) additive cross-batch mask

    ln2_g = V[0:1, :D]
    ln2_b = V[1:2, :D]
    ln3_g = V[2:3, :D]
    ln3_b = V[3:4, :D]
    b_qk = V[4:5, :2 * D]             # [bq*scale | bk]
    b_v = V[5:6, :D]
    b_o = V[6:7, :D]
    b_1 = V[7:8, :FF]
    b_2 = V[8:9, :D]

    def layernorm(v, g, b):
        mu = jnp.mean(v, axis=-1, keepdims=True)
        var = jnp.mean((v - mu) ** 2, axis=-1, keepdims=True)
        return (v - mu) * lax.rsqrt(var + EPS) * g + b

    # ---- self-attention block (pre-norm) ----
    t2 = layernorm(x, ln2_g, ln2_b)                               # norm2(tgt)

    # fused Q|K|V projection: one MXU push on [t2 ; pos] x [Wq*s | Wk | Wv]
    lhs2 = jnp.concatenate([t2, pos], axis=0).astype(bf16)        # (2*BS, D)
    R = jnp.dot(lhs2, Wqkv, preferred_element_type=f32)           # (2*BS, 3D)
    qk = R[:BS, :2 * D] + R[BS:, :2 * D] + b_qk                   # (t2+pos)@[Wq|Wk]+b
    v = R[:BS, 2 * D:] + b_v                                      # t2@Wv + bv
    q = qk[:, :D]                                                 # (BS, D)
    k = qk[:, D:]                                                 # (BS, D)

    # head-stacked scores: block-diagonal Q (heads along sublanes) vs full K
    q_bd = jnp.concatenate([q] * H, axis=0) * head_sel            # (HB, D)
    s = lax.dot_general(q_bd, k, (((1,), (1,)), ((), ())),
                        preferred_element_type=f32)               # (HB, BS)
    s = s + attn_bias
    s = s - jnp.max(s, axis=-1, keepdims=True)
    p = jnp.exp(s)                                                # unnormalized
    inv = pl.reciprocal(jnp.sum(p, axis=-1, keepdims=True), approx=True)  # (HB,1)

    pv = jnp.dot(p, v, preferred_element_type=f32)                # (HB, D)
    o_stack = pv * inv * head_sel                                 # normalize + select
    o_cat = o_stack[0:BS]
    for h in range(1, H):                                         # sublane-block fold
        o_cat = o_cat + o_stack[h * BS:(h + 1) * BS]              # (BS, D)

    attn = jnp.dot(o_cat.astype(bf16), Wo, preferred_element_type=f32) + b_o
    x = x + attn                                                  # tgt + dropout2(tgt2)

    # TODO(synk): xattn (externally injected cross-attention sub-module) is not a
    # parameter of this layer; only the xattn=None path is implemented.

    # ---- FFN block (pre-norm) ----
    t3 = layernorm(x, ln3_g, ln3_b)
    h1 = jnp.dot(t3.astype(bf16), Wf1, preferred_element_type=f32) + b_1
    h1 = jnp.maximum(h1, 0.0)                                     # ReLU
    ffn = jnp.dot(h1.astype(bf16), Wf2, preferred_element_type=f32) + b_2
    out_ref[...] = (x + ffn).astype(out_ref.dtype)


# ----------------------------- param packing --------------------------------
def pack_params(p):
    """Pack torch-layout parameters (and static masks) into kernel slabs."""
    scale = 1.0 / math.sqrt(DH)
    ipw, ipb = p["in_proj_w"], p["in_proj_b"]

    wq_t = ipw[:D].T * scale                      # 1/sqrt(head_dim) folded into Wq
    wk_t = ipw[D:2 * D].T
    wv_t = ipw[2 * D:].T
    w_qkv = jnp.concatenate([wq_t, wk_t, wv_t], axis=1).astype(jnp.bfloat16)  # (D,3D)
    w_o = p["out_proj_w"].T.astype(jnp.bfloat16)                              # (D,D)
    w_f1 = p["lin1_w"].T.astype(jnp.bfloat16)                                 # (D,FF)
    w_f2 = p["lin2_w"].T.astype(jnp.bfloat16)                                 # (FF,D)

    def row(vec):
        return jnp.pad(vec, (0, VW - vec.shape[0]))

    vecs = jnp.stack([
        row(p["ln2_g"]), row(p["ln2_b"]), row(p["ln3_g"]), row(p["ln3_b"]),
        row(jnp.concatenate([ipb[:D] * scale, ipb[D:2 * D]])),   # [bq*s | bk]
        row(ipb[2 * D:]),                                        # bv
        row(p["out_proj_b"]),                                    # bo
        row(p["lin1_b"]),                                        # b1
        row(p["lin2_b"]),                                        # b2
    ]).astype(jnp.float32)                                       # (9, VW)

    # Static masks (hoisted out of the kernel).
    i = np.arange(HB)
    head_sel = ((i[:, None] // BS) == (np.arange(D)[None, :] // DH)).astype(np.float32)
    rb = (i % BS) // S                                           # query batch id
    cb = np.arange(BS) // S                                      # key batch id
    bias = np.where(rb[:, None] == cb[None, :], 0.0, NEG).astype(np.float32)  # (HB,BS)
    bias_pad = np.zeros((HB, D), np.float32)
    bias_pad[:, :BS] = bias
    masks = jnp.asarray(np.concatenate([head_sel, bias_pad], axis=0))  # (2*HB, D)

    return {"w_qkv": w_qkv, "w_o": w_o, "w_f1": w_f1, "w_f2": w_f2,
            "vecs": vecs, "masks": masks}


# ------------------------------- wrapper ------------------------------------
@jax.jit
def prenorm_global_decoder_layer(tgt, query_pos, packed):
    """tgt, query_pos: (B, S, D).  Returns (B, S, D)."""
    Bn, Sn, Dn = tgt.shape
    rows = Bn * Sn
    x2d = tgt.reshape(rows, Dn)
    pos2d = query_pos.reshape(rows, Dn)

    flops = (2 * (2 * rows) * Dn * (3 * Dn)     # fused QKV
             + 2 * H * rows * rows * Dn * 2     # scores + PV
             + 2 * rows * Dn * Dn               # out proj
             + 2 * rows * Dn * FF * 2)          # FFN
    transcendentals = H * rows * rows + H * rows + 2 * rows
    bytes_accessed = (x2d.nbytes + pos2d.nbytes + packed["w_qkv"].nbytes
                      + packed["w_o"].nbytes + packed["w_f1"].nbytes
                      + packed["w_f2"].nbytes + packed["vecs"].nbytes
                      + packed["masks"].nbytes + rows * Dn * 4)

    out2d = pl.pallas_call(
        _decoder_layer_kernel,
        out_shape=jax.ShapeDtypeStruct((rows, Dn), tgt.dtype),
        cost_estimate=pl.CostEstimate(flops=flops,
                                      transcendentals=transcendentals,
                                      bytes_accessed=bytes_accessed),
    )(x2d, pos2d, packed["w_qkv"], packed["w_o"], packed["w_f1"],
      packed["w_f2"], packed["vecs"], packed["masks"])
    return out2d.reshape(Bn, Sn, Dn)


# --------------------------- reference (pure JAX) ----------------------------
def _reference(tgt, query_pos, p):
    def ln(x, g, b):
        mu = x.mean(-1, keepdims=True)
        var = ((x - mu) ** 2).mean(-1, keepdims=True)
        return (x - mu) / jnp.sqrt(var + EPS) * g + b

    ipw, ipb = p["in_proj_w"], p["in_proj_b"]
    t2 = ln(tgt, p["ln2_g"], p["ln2_b"])
    qk = t2 + query_pos
    q = qk @ ipw[:D].T + ipb[:D]
    k = qk @ ipw[D:2 * D].T + ipb[D:2 * D]
    v = t2 @ ipw[2 * D:].T + ipb[2 * D:]

    def heads(x):  # (B,S,D) -> (B,H,S,DH)
        return x.reshape(B, S, H, DH).transpose(0, 2, 1, 3)

    qh, kh, vh = heads(q), heads(k), heads(v)
    s = jnp.einsum("bhqd,bhkd->bhqk", qh, kh) / math.sqrt(DH)
    a = jax.nn.softmax(s, axis=-1)
    o = jnp.einsum("bhqk,bhkd->bhqd", a, vh).transpose(0, 2, 1, 3).reshape(B, S, D)
    o = o @ p["out_proj_w"].T + p["out_proj_b"]
    x = tgt + o

    t2 = ln(x, p["ln3_g"], p["ln3_b"])
    hdn = jnp.maximum(t2 @ p["lin1_w"].T + p["lin1_b"], 0.0)
    x = x + hdn @ p["lin2_w"].T + p["lin2_b"]
    return x


# ------------------------------ param init -----------------------------------
def init_params(key):
    ks = jax.random.split(key, 12)
    n = lambda k, shape: jax.random.normal(k, shape, jnp.float32) * 0.02
    return {
        "ln2_g": 1.0 + n(ks[0], (D,)), "ln2_b": n(ks[1], (D,)),
        "ln3_g": 1.0 + n(ks[2], (D,)), "ln3_b": n(ks[3], (D,)),
        "in_proj_w": n(ks[4], (3 * D, D)), "in_proj_b": n(ks[5], (3 * D,)),
        "out_proj_w": n(ks[6], (D, D)), "out_proj_b": n(ks[7], (D,)),
        "lin1_w": n(ks[8], (FF, D)), "lin1_b": n(ks[9], (FF,)),
        "lin2_w": n(ks[10], (D, FF)), "lin2_b": n(ks[11], (D,)),
    }


# --------------------------------- main --------------------------------------
if __name__ == "__main__":
    key = jax.random.PRNGKey(0)
    k_tgt, k_pos, k_par = jax.random.split(key, 3)
    tgt = jax.random.normal(k_tgt, (B, S, D), jnp.float32)
    query_pos = jax.random.normal(k_pos, (B, S, D), jnp.float32)
    params = init_params(k_par)
    packed = pack_params(params)

    out = prenorm_global_decoder_layer(tgt, query_pos, packed)
    out = jax.block_until_ready(out)

    ref = _reference(tgt, query_pos, params)
    assert out.shape == (B, S, D)
    assert bool(jnp.all(jnp.isfinite(out)))
    assert bool(jnp.allclose(out, ref, atol=2e-3, rtol=2e-3)), "mismatch vs reference"
    print("KERNEL_OK")
</pallas_src>

<mosaic_0001>
module attributes {stable_mosaic.version = 11 : i64} {
  func.func @_decoder_layer_kernel(%arg0: memref<16x32xf32, #tpu.memory_space<vmem>>, %arg1: memref<16x32xf32, #tpu.memory_space<vmem>>, %arg2: memref<32x96xbf16, #tpu.memory_space<vmem>>, %arg3: memref<32x32xbf16, #tpu.memory_space<vmem>>, %arg4: memref<32x64xbf16, #tpu.memory_space<vmem>>, %arg5: memref<64x32xbf16, #tpu.memory_space<vmem>>, %arg6: memref<9x64xf32, #tpu.memory_space<vmem>>, %arg7: memref<128x32xf32, #tpu.memory_space<vmem>>, %arg8: memref<16x32xf32, #tpu.memory_space<vmem>>) attributes {dimension_semantics = [], scalar_prefetch = 0 : i64, scratch_operands = 0 : i64, tpu.core_type = #tpu.core_type<tc>} {
    %c0 = arith.constant 0 : index
    %c0_0 = arith.constant 0 : index
    %0 = vector.load %arg0[%c0, %c0_0] : memref<16x32xf32, #tpu.memory_space<vmem>>, vector<16x32xf32>
    %c0_1 = arith.constant 0 : index
    %c0_2 = arith.constant 0 : index
    %1 = vector.load %arg1[%c0_1, %c0_2] : memref<16x32xf32, #tpu.memory_space<vmem>>, vector<16x32xf32>
    %c0_3 = arith.constant 0 : index
    %c0_4 = arith.constant 0 : index
    %2 = vector.load %arg2[%c0_3, %c0_4] : memref<32x96xbf16, #tpu.memory_space<vmem>>, vector<32x96xbf16>
    %c0_5 = arith.constant 0 : index
    %c0_6 = arith.constant 0 : index
    %3 = vector.load %arg3[%c0_5, %c0_6] : memref<32x32xbf16, #tpu.memory_space<vmem>>, vector<32x32xbf16>
    %c0_7 = arith.constant 0 : index
    %c0_8 = arith.constant 0 : index
    %4 = vector.load %arg4[%c0_7, %c0_8] : memref<32x64xbf16, #tpu.memory_space<vmem>>, vector<32x64xbf16>
    %c0_9 = arith.constant 0 : index
    %c0_10 = arith.constant 0 : index
    %5 = vector.load %arg5[%c0_9, %c0_10] : memref<64x32xbf16, #tpu.memory_space<vmem>>, vector<64x32xbf16>
    %c0_11 = arith.constant 0 : index
    %c0_12 = arith.constant 0 : index
    %6 = vector.load %arg6[%c0_11, %c0_12] : memref<9x64xf32, #tpu.memory_space<vmem>>, vector<9x64xf32>
    %c0_13 = arith.constant 0 : index
    %c0_14 = arith.constant 0 : index
    %7 = vector.load %arg7[%c0_13, %c0_14] : memref<128x32xf32, #tpu.memory_space<vmem>>, vector<128x32xf32>
    %8 = vector.extract_strided_slice %7 {offsets = [0, 0], sizes = [64, 32], strides = [1, 1]} : vector<128x32xf32> to vector<64x32xf32>
    %9 = vector.extract_strided_slice %7 {offsets = [64, 0], sizes = [64, 16], strides = [1, 1]} : vector<128x32xf32> to vector<64x16xf32>
    %10 = vector.extract_strided_slice %6 {offsets = [0, 0], sizes = [1, 32], strides = [1, 1]} : vector<9x64xf32> to vector<1x32xf32>
    %11 = vector.extract_strided_slice %6 {offsets = [1, 0], sizes = [1, 32], strides = [1, 1]} : vector<9x64xf32> to vector<1x32xf32>
    %12 = vector.extract_strided_slice %6 {offsets = [2, 0], sizes = [1, 32], strides = [1, 1]} : vector<9x64xf32> to vector<1x32xf32>
    %13 = vector.extract_strided_slice %6 {offsets = [3, 0], sizes = [1, 32], strides = [1, 1]} : vector<9x64xf32> to vector<1x32xf32>
    %14 = vector.extract_strided_slice %6 {offsets = [4, 0], sizes = [1, 64], strides = [1, 1]} : vector<9x64xf32> to vector<1x64xf32>
    %15 = vector.extract_strided_slice %6 {offsets = [5, 0], sizes = [1, 32], strides = [1, 1]} : vector<9x64xf32> to vector<1x32xf32>
    %16 = vector.extract_strided_slice %6 {offsets = [6, 0], sizes = [1, 32], strides = [1, 1]} : vector<9x64xf32> to vector<1x32xf32>
    %17 = vector.extract_strided_slice %6 {offsets = [7, 0], sizes = [1, 64], strides = [1, 1]} : vector<9x64xf32> to vector<1x64xf32>
    %18 = vector.extract_strided_slice %6 {offsets = [8, 0], sizes = [1, 32], strides = [1, 1]} : vector<9x64xf32> to vector<1x32xf32>
    %cst = arith.constant dense<0.000000e+00> : vector<16xf32>
    %19 = vector.multi_reduction <add>, %0, %cst [1] : vector<16x32xf32> to vector<16xf32>
    %20 = vector.shape_cast %19 : vector<16xf32> to vector<16x1xf32>
    %cst_15 = arith.constant 3.200000e+01 : f32
    %21 = vector.broadcast %cst_15 : f32 to vector<16x1xf32>
    %22 = arith.divf %20, %21 : vector<16x1xf32>
    %23 = vector.broadcast %22 : vector<16x1xf32> to vector<16x32xf32>
    %24 = arith.subf %0, %23 : vector<16x32xf32>
    %25 = arith.mulf %24, %24 : vector<16x32xf32>
    %cst_16 = arith.constant dense<0.000000e+00> : vector<16xf32>
    %26 = vector.multi_reduction <add>, %25, %cst_16 [1] : vector<16x32xf32> to vector<16xf32>
    %27 = vector.shape_cast %26 : vector<16xf32> to vector<16x1xf32>
    %cst_17 = arith.constant 3.200000e+01 : f32
    %28 = vector.broadcast %cst_17 : f32 to vector<16x1xf32>
    %29 = arith.divf %27, %28 : vector<16x1xf32>
    %30 = vector.broadcast %22 : vector<16x1xf32> to vector<16x32xf32>
    %31 = arith.subf %0, %30 : vector<16x32xf32>
    %cst_18 = arith.constant 9.99999974E-6 : f32
    %32 = vector.broadcast %cst_18 : f32 to vector<16x1xf32>
    %33 = arith.addf %29, %32 : vector<16x1xf32>
    %34 = math.rsqrt %33 : vector<16x1xf32>
    %35 = vector.broadcast %34 : vector<16x1xf32> to vector<16x32xf32>
    %36 = arith.mulf %31, %35 : vector<16x32xf32>
    %37 = vector.broadcast %10 : vector<1x32xf32> to vector<16x32xf32>
    %38 = arith.mulf %36, %37 : vector<16x32xf32>
    %39 = vector.broadcast %11 : vector<1x32xf32> to vector<16x32xf32>
    %40 = arith.addf %38, %39 : vector<16x32xf32>
    %41 = tpu.concatenate %40, %1 in 0 : vector<16x32xf32>, vector<16x32xf32> -> vector<32x32xf32>
    %42 = arith.truncf %41 : vector<32x32xf32> to vector<32x32xbf16>
    %cst_19 = arith.constant dense<0.000000e+00> : vector<32x96xf32>
    %43 = tpu.matmul %42, %2, %cst_19 {dimension_numbers = #tpu.dot_dimension_numbers<[1], [0], [0], [1], [0, 0, 1, 1], [], []>} : vector<32x32xbf16>, vector<32x96xbf16>, vector<32x96xf32> -> vector<32x96xf32>
    %44 = vector.extract_strided_slice %43 {offsets = [0, 0], sizes = [16, 64], strides = [1, 1]} : vector<32x96xf32> to vector<16x64xf32>
    %45 = vector.extract_strided_slice %43 {offsets = [16, 0], sizes = [16, 64], strides = [1, 1]} : vector<32x96xf32> to vector<16x64xf32>
    %46 = arith.addf %44, %45 : vector<16x64xf32>
    %47 = vector.broadcast %14 : vector<1x64xf32> to vector<16x64xf32>
    %48 = arith.addf %46, %47 : vector<16x64xf32>
    %49 = vector.extract_strided_slice %43 {offsets = [0, 64], sizes = [16, 32], strides = [1, 1]} : vector<32x96xf32> to vector<16x32xf32>
    %50 = vector.broadcast %15 : vector<1x32xf32> to vector<16x32xf32>
    %51 = arith.addf %49, %50 : vector<16x32xf32>
    %52 = vector.extract_strided_slice %48 {offsets = [0, 0], sizes = [16, 32], strides = [1, 1]} : vector<16x64xf32> to vector<16x32xf32>
    %53 = vector.extract_strided_slice %48 {offsets = [0, 32], sizes = [16, 32], strides = [1, 1]} : vector<16x64xf32> to vector<16x32xf32>
    %54 = tpu.concatenate %52, %52, %52, %52 in 0 : vector<16x32xf32>, vector<16x32xf32>, vector<16x32xf32>, vector<16x32xf32> -> vector<64x32xf32>
    %55 = arith.mulf %54, %8 : vector<64x32xf32>
    %cst_20 = arith.constant dense<0.000000e+00> : vector<64x16xf32>
    %56 = tpu.matmul %55, %53, %cst_20 {dimension_numbers = #tpu.dot_dimension_numbers<[1], [1], [0], [0], [0, 0, 1, 0], [], []>} : vector<64x32xf32>, vector<16x32xf32>, vector<64x16xf32> -> vector<64x16xf32>
    %57 = arith.addf %56, %9 : vector<64x16xf32>
    %cst_21 = arith.constant dense<0xFF800000> : vector<64xf32>
    %58 = vector.multi_reduction <maximumf>, %57, %cst_21 [1] : vector<64x16xf32> to vector<64xf32>
    %59 = vector.shape_cast %58 : vector<64xf32> to vector<64x1xf32>
    %60 = vector.broadcast %59 : vector<64x1xf32> to vector<64x16xf32>
    %61 = arith.subf %57, %60 : vector<64x16xf32>
    %62 = math.exp %61 : vector<64x16xf32>
    %cst_22 = arith.constant dense<0.000000e+00> : vector<64xf32>
    %63 = vector.multi_reduction <add>, %62, %cst_22 [1] : vector<64x16xf32> to vector<64xf32>
    %64 = vector.shape_cast %63 : vector<64xf32> to vector<64x1xf32>
    %65 = tpu.reciprocal %64 {approx = true} : vector<64x1xf32> -> vector<64x1xf32>
    %cst_23 = arith.constant dense<0.000000e+00> : vector<64x32xf32>
    %66 = tpu.matmul %62, %51, %cst_23 {dimension_numbers = #tpu.dot_dimension_numbers<[1], [0], [0], [1], [0, 0, 1, 1], [], []>} : vector<64x16xf32>, vector<16x32xf32>, vector<64x32xf32> -> vector<64x32xf32>
    %67 = vector.broadcast %65 : vector<64x1xf32> to vector<64x32xf32>
    %68 = arith.mulf %66, %67 : vector<64x32xf32>
    %69 = arith.mulf %68, %8 : vector<64x32xf32>
    %70 = vector.extract_strided_slice %69 {offsets = [0, 0], sizes = [16, 32], strides = [1, 1]} : vector<64x32xf32> to vector<16x32xf32>
    %71 = vector.extract_strided_slice %69 {offsets = [16, 0], sizes = [16, 32], strides = [1, 1]} : vector<64x32xf32> to vector<16x32xf32>
    %72 = arith.addf %70, %71 : vector<16x32xf32>
    %73 = vector.extract_strided_slice %69 {offsets = [32, 0], sizes = [16, 32], strides = [1, 1]} : vector<64x32xf32> to vector<16x32xf32>
    %74 = arith.addf %72, %73 : vector<16x32xf32>
    %75 = vector.extract_strided_slice %69 {offsets = [48, 0], sizes = [16, 32], strides = [1, 1]} : vector<64x32xf32> to vector<16x32xf32>
    %76 = arith.addf %74, %75 : vector<16x32xf32>
    %77 = arith.truncf %76 : vector<16x32xf32> to vector<16x32xbf16>
    %cst_24 = arith.constant dense<0.000000e+00> : vector<16x32xf32>
    %78 = tpu.matmul %77, %3, %cst_24 {dimension_numbers = #tpu.dot_dimension_numbers<[1], [0], [0], [1], [0, 0, 1, 1], [], []>} : vector<16x32xbf16>, vector<32x32xbf16>, vector<16x32xf32> -> vector<16x32xf32>
    %79 = vector.broadcast %16 : vector<1x32xf32> to vector<16x32xf32>
    %80 = arith.addf %78, %79 : vector<16x32xf32>
    %81 = arith.addf %0, %80 : vector<16x32xf32>
    %cst_25 = arith.constant dense<0.000000e+00> : vector<16xf32>
    %82 = vector.multi_reduction <add>, %81, %cst_25 [1] : vector<16x32xf32> to vector<16xf32>
    %83 = vector.shape_cast %82 : vector<16xf32> to vector<16x1xf32>
    %cst_26 = arith.constant 3.200000e+01 : f32
    %84 = vector.broadcast %cst_26 : f32 to vector<16x1xf32>
    %85 = arith.divf %83, %84 : vector<16x1xf32>
    %86 = vector.broadcast %85 : vector<16x1xf32> to vector<16x32xf32>
    %87 = arith.subf %81, %86 : vector<16x32xf32>
    %88 = arith.mulf %87, %87 : vector<16x32xf32>
    %cst_27 = arith.constant dense<0.000000e+00> : vector<16xf32>
    %89 = vector.multi_reduction <add>, %88, %cst_27 [1] : vector<16x32xf32> to vector<16xf32>
    %90 = vector.shape_cast %89 : vector<16xf32> to vector<16x1xf32>
    %cst_28 = arith.constant 3.200000e+01 : f32
    %91 = vector.broadcast %cst_28 : f32 to vector<16x1xf32>
    %92 = arith.divf %90, %91 : vector<16x1xf32>
    %93 = vector.broadcast %85 : vector<16x1xf32> to vector<16x32xf32>
    %94 = arith.subf %81, %93 : vector<16x32xf32>
    %cst_29 = arith.constant 9.99999974E-6 : f32
    %95 = vector.broadcast %cst_29 : f32 to vector<16x1xf32>
    %96 = arith.addf %92, %95 : vector<16x1xf32>
    %97 = math.rsqrt %96 : vector<16x1xf32>
    %98 = vector.broadcast %97 : vector<16x1xf32> to vector<16x32xf32>
    %99 = arith.mulf %94, %98 : vector<16x32xf32>
    %100 = vector.broadcast %12 : vector<1x32xf32> to vector<16x32xf32>
    %101 = arith.mulf %99, %100 : vector<16x32xf32>
    %102 = vector.broadcast %13 : vector<1x32xf32> to vector<16x32xf32>
    %103 = arith.addf %101, %102 : vector<16x32xf32>
    %104 = arith.truncf %103 : vector<16x32xf32> to vector<16x32xbf16>
    %cst_30 = arith.constant dense<0.000000e+00> : vector<16x64xf32>
    %105 = tpu.matmul %104, %4, %cst_30 {dimension_numbers = #tpu.dot_dimension_numbers<[1], [0], [0], [1], [0, 0, 1, 1], [], []>} : vector<16x32xbf16>, vector<32x64xbf16>, vector<16x64xf32> -> vector<16x64xf32>
    %106 = vector.broadcast %17 : vector<1x64xf32> to vector<16x64xf32>
    %107 = arith.addf %105, %106 : vector<16x64xf32>
    %cst_31 = arith.constant 0.000000e+00 : f32
    %108 = vector.broadcast %cst_31 : f32 to vector<16x64xf32>
    %109 = arith.maximumf %107, %108 : vector<16x64xf32>
    %110 = arith.truncf %109 : vector<16x64xf32> to vector<16x64xbf16>
    %cst_32 = arith.constant dense<0.000000e+00> : vector<16x32xf32>
    %111 = tpu.matmul %110, %5, %cst_32 {dimension_numbers = #tpu.dot_dimension_numbers<[1], [0], [0], [1], [0, 0, 1, 1], [], []>} : vector<16x64xbf16>, vector<64x32xbf16>, vector<16x32xf32> -> vector<16x32xf32>
    %112 = vector.broadcast %18 : vector<1x32xf32> to vector<16x32xf32>
    %113 = arith.addf %111, %112 : vector<16x32xf32>
    %114 = arith.addf %81, %113 : vector<16x32xf32>
    %c0_33 = arith.constant 0 : index
    %c0_34 = arith.constant 0 : index
    %115 = vector.load %arg8[%c0_33, %c0_34] : memref<16x32xf32, #tpu.memory_space<vmem>>, vector<16x32xf32>
    tpu.vector_store %arg8[%c0_33, %c0_34], %114 {strides = array<i32>} : memref<16x32xf32, #tpu.memory_space<vmem>>, vector<16x32xf32>,
    return
  }
}

</mosaic_0001>

<llo_original>
// kernel: prenorm_global_decoder_layer.1
$region0: #{prenorm_global_decoder_layer.1}
  #allocation0 [shape = 'u32[]', space=smem, size = 0x4, offset = 0x4, fixed_abs, tag = 'smem constant byte address 0x4 - core index']
  #allocation1 [shape = 'u32[144,128]{1,0:T(1,128)}', space=vmem, size = 0x12000, scoped, tag = 'internal scratch']
  %s0 = inlined_call_operand.vmem [shape: f32[16,32], index: 0, kind: input, shape index: {}]
  %s1 = inlined_call_operand.vmem [shape: f32[16,32], index: 1, kind: input, shape index: {}]
  %s2 = inlined_call_operand.vmem [shape: bf16[32,96], index: 2, kind: input, shape index: {}]
  %s3 = inlined_call_operand.vmem [shape: bf16[32,32], index: 3, kind: input, shape index: {}]
  %s4 = inlined_call_operand.vmem [shape: bf16[32,64], index: 4, kind: input, shape index: {}]
  %s5 = inlined_call_operand.vmem [shape: bf16[64,32], index: 5, kind: input, shape index: {}]
  %s6 = inlined_call_operand.vmem [shape: f32[9,64], index: 6, kind: input, shape index: {}]
  %s7 = inlined_call_operand.vmem [shape: f32[128,32], index: 7, kind: input, shape index: {}]
  %s8 = inlined_call_operand.hbm [shape: f32[16,32], index: 8, kind: output, shape index: {}]
  %s9 = sld [smem:[#allocation0]]
  $region42: #{prenorm_global_decoder_layer.1} parent=0
    _
  %s11 = ssub.s32 1, %s9
  %s12 = scalar_select 0, %s11, %s9
  $region1: #{prenorm_global_decoder_layer.1} parent=0
    #allocation2 [shape = 'u8[8192]{0}', space=vmem, size = 0x2000, scoped, tag = 'output window, operand 0, single buffered']
    #allocation3 [shape = 's32[1]{0}', space=sflag, size = 0x4, scoped, tag = 'scoped memory for prenorm_global_decoder_layer.1']
    %13 = vsyncpa [#allocation3], 0
    // Predicated region
    $region2: #{prenorm_global_decoder_layer.1} parent=1 // pred_check
      _
    $region3: #{prenorm_global_decoder_layer.1} parent=1 // pred_check_branch
      %15 = sbr.rel (0) target = $region5
    $region4: #{prenorm_global_decoder_layer.1} parent=1 // pred_region
      _
    $region5: #{prenorm_global_decoder_layer.1} parent=1 // pred_fallthru
      _
    // Predicated region
    $region6: #{prenorm_global_decoder_layer.1} parent=1 // pred_check
      _
    $region7: #{prenorm_global_decoder_layer.1} parent=1 // pred_check_branch
      %17 = sbr.rel (0) target = $region9
    $region8: #{prenorm_global_decoder_layer.1} parent=1 // pred_region
      _
    $region9: #{prenorm_global_decoder_layer.1} parent=1 // pred_fallthru
      _
    // Predicated region
    $region10: #{prenorm_global_decoder_layer.1} parent=1 // pred_check
      _
    $region11: #{prenorm_global_decoder_layer.1} parent=1 // pred_check_branch
      %19 = sbr.rel (0) target = $region13
    $region12: #{prenorm_global_decoder_layer.1} parent=1 // pred_region
      _
    $region13: #{prenorm_global_decoder_layer.1} parent=1 // pred_fallthru
      _
    // Predicated region
    $region14: #{prenorm_global_decoder_layer.1} parent=1 // pred_check
      _
    $region15: #{prenorm_global_decoder_layer.1} parent=1 // pred_check_branch
      %21 = sbr.rel (0) target = $region17
    $region16: #{prenorm_global_decoder_layer.1} parent=1 // pred_region
      _
    $region17: #{prenorm_global_decoder_layer.1} parent=1 // pred_fallthru
      _
    // Predicated region
    $region18: #{prenorm_global_decoder_layer.1} parent=1 // pred_check
      _
    $region19: #{prenorm_global_decoder_layer.1} parent=1 // pred_check_branch
      %23 = sbr.rel (0) target = $region21
    $region20: #{prenorm_global_decoder_layer.1} parent=1 // pred_region
      _
    $region21: #{prenorm_global_decoder_layer.1} parent=1 // pred_fallthru
      _
    // Predicated region
    $region22: #{prenorm_global_decoder_layer.1} parent=1 // pred_check
      _
    $region23: #{prenorm_global_decoder_layer.1} parent=1 // pred_check_branch
      %25 = sbr.rel (0) target = $region25
    $region24: #{prenorm_global_decoder_layer.1} parent=1 // pred_region
      _
    $region25: #{prenorm_global_decoder_layer.1} parent=1 // pred_fallthru
      _
    // Predicated region
    $region26: #{prenorm_global_decoder_layer.1} parent=1 // pred_check
      _
    $region27: #{prenorm_global_decoder_layer.1} parent=1 // pred_check_branch
      %27 = sbr.rel (0) target = $region29
    $region28: #{prenorm_global_decoder_layer.1} parent=1 // pred_region
      _
    $region29: #{prenorm_global_decoder_layer.1} parent=1 // pred_fallthru
      _
    // Predicated region
    $region30: #{prenorm_global_decoder_layer.1} parent=1 // pred_check
      _
    $region31: #{prenorm_global_decoder_layer.1} parent=1 // pred_check_branch
      %29 = sbr.rel (0) target = $region33
    $region32: #{prenorm_global_decoder_layer.1} parent=1 // pred_region
      _
    $region33: #{prenorm_global_decoder_layer.1} parent=1 // pred_fallthru
      _
    %v31 = vld [vmem:[%s0] sm:$0xff]
    %v32 = vld [vmem:[%s0 + $0x8] sm:$0xff]
    %v33 = vld [vmem:[%s1] sm:$0xff]
    %v34 = vld [vmem:[%s1 + $0x8] sm:$0xff]
    %v35 = vld [vmem:[%s2] sm:$0xf]
    %v36 = vld [vmem:[%s2 + $0x4] sm:$0xf]
    %v37 = vld [vmem:[%s2 + $0x8] sm:$0xf]
    %v38 = vld [vmem:[%s2 + $0xc] sm:$0xf]
    %v39 = vld [vmem:[%s3] sm:$0xf]
    %v40 = vld [vmem:[%s3 + $0x4] sm:$0xf]
    %v41 = vld [vmem:[%s3 + $0x8] sm:$0xf]
    %v42 = vld [vmem:[%s3 + $0xc] sm:$0xf]
    %v43 = vld [vmem:[%s4] sm:$0xf]
    %v44 = vld [vmem:[%s4 + $0x4] sm:$0xf]
    %v45 = vld [vmem:[%s4 + $0x8] sm:$0xf]
    %v46 = vld [vmem:[%s4 + $0xc] sm:$0xf]
    %v47 = vld [vmem:[%s5] sm:$0xf]
    %v48 = vld [vmem:[%s5 + $0x4] sm:$0xf]
    %v49 = vld [vmem:[%s5 + $0x8] sm:$0xf]
    %v50 = vld [vmem:[%s5 + $0xc] sm:$0xf]
    %v51 = vld [vmem:[%s5 + $0x10] sm:$0xf]
    %v52 = vld [vmem:[%s5 + $0x14] sm:$0xf]
    %v53 = vld [vmem:[%s5 + $0x18] sm:$0xf]
    %v54 = vld [vmem:[%s5 + $0x1c] sm:$0xf]
    %v55 = vld [vmem:[%s6] sm:$0xff]
    %v56 = vld [vmem:[%s6 + $0x8] sm:$0x1]
    %v57 = vld [vmem:[%s7] sm:$0xff]
    %v58 = vld [vmem:[%s7 + $0x8] sm:$0xff]
    %v59 = vld [vmem:[%s7 + $0x10] sm:$0xff]
    %v60 = vld [vmem:[%s7 + $0x18] sm:$0xff]
    %v61 = vld [vmem:[%s7 + $0x20] sm:$0xff]
    %v62 = vld [vmem:[%s7 + $0x28] sm:$0xff]
    %v63 = vld [vmem:[%s7 + $0x30] sm:$0xff]
    %v64 = vld [vmem:[%s7 + $0x38] sm:$0xff]
    %v65 = vld [vmem:[%s7 + $0x40] sm:$0xff]
    %v66 = vld [vmem:[%s7 + $0x48] sm:$0xff]
    %v67 = vld [vmem:[%s7 + $0x50] sm:$0xff]
    %v68 = vld [vmem:[%s7 + $0x58] sm:$0xff]
    %v69 = vld [vmem:[%s7 + $0x60] sm:$0xff]
    %v70 = vld [vmem:[%s7 + $0x68] sm:$0xff]
    %v71 = vld [vmem:[%s7 + $0x70] sm:$0xff]
    %v72 = vld [vmem:[%s7 + $0x78] sm:$0xff]
    %vm73 = vcmask 261120
    %v74 = vsel %vm73, %v31, 0.0
    %75 = vadd.xlane.f32.xlu0 %v74
    %v76 = vpop.xlane.xlu0 %75
    %v77 = vsel %vm73, %v32, 0.0
    %78 = vadd.xlane.f32.xlu0 %v77
    %v79 = vpop.xlane.xlu0 %78
    %v80 = vrcp.pop 32.0
    %v81 = vmul.f32 %v76, %v80
    %v82 = vmul.f32 %v79, %v80
    %v83 = vsub.f32 %v31, %v81
    %v84 = vsub.f32 %v32, %v82
    %v85 = vmul.f32 %v83, %v83
    %v86 = vmul.f32 %v84, %v84
    %v87 = vsel %vm73, %v85, 0.0
    %88 = vadd.xlane.f32.xlu0 %v87
    %v89 = vpop.xlane.xlu0 %88
    %v90 = vsel %vm73, %v86, 0.0
    %91 = vadd.xlane.f32.xlu0 %v90
    %v92 = vpop.xlane.xlu0 %91
    %v93 = vmul.f32 %v89, %v80
    %v94 = vmul.f32 %v92, %v80
    %v95 = vadd.f32 %v93, 1e-05
    %v96 = vadd.f32 %v94, 1e-05
    %v97 = vrsqrt.pop %v95
    %v98 = vrsqrt.pop %v96
    %v99 = vmul.f32 %v83, %v97
    %v100 = vmul.f32 %v84, %v98
    %v101 = vlaneseq
    %v102 = vshrl.u32 %v101, 7
    %v103 = vsub.s32 0, %v102
    %v104 = vrot.slane %v55, %v103
    %v105 = vmul.f32 %v99, %v104
    %v106 = vmul.f32 %v100, %v104
    %v107 = vlaneseq
    %v108 = vshrl.u32 %v107, 7
    %v109 = vsub.s32 1, %v108
    %v110 = vrot.slane %v55, %v109
    %v111 = vadd.f32 %v105, %v110
    %v112 = vadd.f32 %v106, %v110
    %v113 = vpack.c.bf16 %v112, %v111
    %v114 = vpack.c.bf16 %v34, %v33
    %v119 = vunpack.c.l.b16 %v35
    %v120 = vunpack.c.l.b16 %v36
    %v121 = vunpack.c.l.b16 %v37
    %v122 = vunpack.c.l.b16 %v38
    %v123 = vpack.c.b16 %v120, %v119
    %v124 = vpack.c.b16 %v122, %v121
    %v128 = vsel %vm73, %v113, 0
    %v131 = vsel %vm73, %v114, 0
    %133 = vmatprep.subr.bf16.mxu0 0
    %134 = vmatpush1.bf16.msra.mxu0 %v123
    %135 = vmatprep.subr.bf16.mxu0 0
    %136 = vmatpush1.bf16.msra.mxu0 %v124
    %137 = vmatprep.subr.bf16.mxu0 0
    %138 = vmatpush1.bf16.msra.mxu0 0
    %139 = vmatprep.subr.bf16.mxu0 0
    %140 = vmatpush1.bf16.msra.mxu0 0
    %141 = vmatprep.subr.bf16.mxu0 0
    %142 = vmatpush1.bf16.msra.mxu0 0
    %143 = vmatprep.subr.bf16.mxu0 0
    %144 = vmatpush1.bf16.msra.mxu0 0
    %145 = vmatprep.subr.bf16.mxu0 0
    %146 = vmatpush1.bf16.msra.mxu0 0
    %147 = vmatprep.subr.bf16.mxu0 0
    %148 = vmatpush1.bf16.msra.mxu0 0
    %149 = vmatprep.subr.bf16.mxu0 0
    %150 = vmatpush1.bf16.msra.mxu0 0
    %151 = vmatprep.subr.bf16.mxu0 0
    %152 = vmatpush1.bf16.msra.mxu0 0
    %153 = vmatprep.subr.bf16.mxu0 0
    %154 = vmatpush1.bf16.msra.mxu0 0
    %155 = vmatprep.subr.bf16.mxu0 0
    %156 = vmatpush1.bf16.msra.mxu0 0
    %157 = vmatprep.subr.bf16.mxu0 0
    %158 = vmatpush1.bf16.msra.mxu0 0
    %159 = vmatprep.subr.bf16.mxu0 0
    %160 = vmatpush1.bf16.msra.mxu0 0
    %161 = vmatprep.subr.bf16.mxu0 0
    %162 = vmatpush1.bf16.msra.mxu0 0
    %163 = vmatprep.subr.bf16.mxu0 0
    %164 = vmatpush1.bf16.msra.mxu0 0
    %165 = vmatprep.mubr.bf16.mxu0 0
    %166 = vmatmul.mubr.bf16.gmra.mrb[0].mxu0 %v128
    %v167 = vpop.f32.mrb[0].mxu0
    %v168 = vadd.f32 0.0, %v167
    %v169 = vpop.f32.mrb[0].mxu0
    %v170 = vpop.f32.mrb[0].mxu0
    %v171 = vadd.f32 0.0, %v170
    %v172 = vpop.f32.mrb[0].mxu0
    %173 = vmatprep.mubr.bf16.mxu0 0
    %174 = vmatmul.mubr.bf16.gmra.mrb[0].mxu0 %v131
    %v175 = vpop.f32.mrb[0].mxu0
    %v176 = vadd.f32 0.0, %v175
    %v177 = vpop.f32.mrb[0].mxu0
    %v178 = vpop.f32.mrb[0].mxu0
    %v179 = vadd.f32 0.0, %v178
    %v180 = vpop.f32.mrb[0].mxu0
    %181 = vdwg.mxu0
    %v182 = vadd.f32 %v168, %v176
    %v183 = vadd.f32 %v171, %v179
    %v184 = vlaneseq
    %v185 = vshrl.u32 %v184, 7
    %v186 = vsub.s32 4, %v185
    %v187 = vrot.slane %v55, %v186
    %v188 = vadd.f32 %v182, %v187
    %v189 = vadd.f32 %v183, %v187
    %v190 = vlaneseq
    %v191 = vshrl.u32 %v190, 7
    %v192 = vsub.s32 5, %v191
    %v193 = vrot.slane %v55, %v192
    %195 = vrot.lane.b32.xlu0 %v193, 64
    %v196 = vpop.permute.xlu0 %195
    %v198 = vadd.f32 %v168, %v196
    %v199 = vadd.f32 %v171, %v196
    %v200 = vmul.f32 %v188, %v57
    %v201 = vmul.f32 %v189, %v58
    %v202 = vmul.f32 %v188, %v59
    %v203 = vmul.f32 %v189, %v60
    %v204 = vmul.f32 %v188, %v61
    %v205 = vmul.f32 %v189, %v62
    %v206 = vmul.f32 %v188, %v63
    %v207 = vmul.f32 %v189, %v64
    %210 = vrot.lane.b32.xlu0 %v188, 96
    %v211 = vpop.permute.xlu0 %210
    %212 = vrot.lane.b32.xlu0 %v189, 96
    %v213 = vpop.permute.xlu0 %212
    %v215 = vsel %vm73, %v200, 0
    %v218 = vsel %vm73, %v201, 0
    %v221 = vsel %vm73, %v202, 0
    %v224 = vsel %vm73, %v203, 0
    %v227 = vsel %vm73, %v204, 0
    %v230 = vsel %vm73, %v205, 0
    %v233 = vsel %vm73, %v206, 0
    %v236 = vsel %vm73, %v207, 0
    %v238 = vsel %vm73, %v211, 0
    %v240 = vsel %vm73, %v213, 0
    %242 = vmatprep.subr.mxu0 0.0
    %243 = vmatpush1.xpose.msra.mxu0 %v238
    %244 = vmatprep.subr.mxu0 0.0
    %245 = vmatpush1.xpose.msra.mxu0 %v240
    %246 = vmatprep.subr.mxu0 0.0
    %247 = vmatpush1.xpose.msra.mxu0 0.0
    %248 = vmatprep.subr.mxu0 0.0
    %249 = vmatpush1.xpose.msra.mxu0 0.0
    %250 = vmatprep.subr.mxu0 0.0
    %251 = vmatpush1.xpose.msra.mxu0 0.0
    %252 = vmatprep.subr.mxu0 0.0
    %253 = vmatpush1.xpose.msra.mxu0 0.0
    %254 = vmatprep.subr.mxu0 0.0
    %255 = vmatpush1.xpose.msra.mxu0 0.0
    %256 = vmatprep.subr.mxu0 0.0
    %257 = vmatpush1.xpose.msra.mxu0 0.0
    %258 = vmatprep.subr.mxu0 0.0
    %259 = vmatpush1.xpose.msra.mxu0 0.0
    %260 = vmatprep.subr.mxu0 0.0
    %261 = vmatpush1.xpose.msra.mxu0 0.0
    %262 = vmatprep.subr.mxu0 0.0
    %263 = vmatpush1.xpose.msra.mxu0 0.0
    %264 = vmatprep.subr.mxu0 0.0
    %265 = vmatpush1.xpose.msra.mxu0 0.0
    %266 = vmatprep.subr.mxu0 0.0
    %267 = vmatpush1.xpose.msra.mxu0 0.0
    %268 = vmatprep.subr.mxu0 0.0
    %269 = vmatpush1.xpose.msra.mxu0 0.0
    %270 = vmatprep.subr.mxu0 0.0
    %271 = vmatpush1.xpose.msra.mxu0 0.0
    %272 = vmatprep.subr.mxu0 0.0
    %273 = vmatpush1.xpose.msra.mxu0 0.0
    %274 = vmatprep.subr.mxu0 0.0
    %275 = vmatpush1.xpose.msra.mxu0 0.0
    %276 = vmatprep.subr.mxu0 0.0
    %277 = vmatpush1.xpose.msra.mxu0 0.0
    %278 = vmatprep.subr.mxu0 0.0
    %279 = vmatpush1.xpose.msra.mxu0 0.0
    %280 = vmatprep.subr.mxu0 0.0
    %281 = vmatpush1.xpose.msra.mxu0 0.0
    %282 = vmatprep.subr.mxu0 0.0
    %283 = vmatpush1.xpose.msra.mxu0 0.0
    %284 = vmatprep.subr.mxu0 0.0
    %285 = vmatpush1.xpose.msra.mxu0 0.0
    %286 = vmatprep.subr.mxu0 0.0
    %287 = vmatpush1.xpose.msra.mxu0 0.0
    %288 = vmatprep.subr.mxu0 0.0
    %289 = vmatpush1.xpose.msra.mxu0 0.0
    %290 = vmatprep.subr.mxu0 0.0
    %291 = vmatpush1.xpose.msra.mxu0 0.0
    %292 = vmatprep.subr.mxu0 0.0
    %293 = vmatpush1.xpose.msra.mxu0 0.0
    %294 = vmatprep.subr.mxu0 0.0
    %295 = vmatpush1.xpose.msra.mxu0 0.0
    %296 = vmatprep.subr.mxu0 0.0
    %297 = vmatpush1.xpose.msra.mxu0 0.0
    %298 = vmatprep.subr.mxu0 0.0
    %299 = vmatpush1.xpose.msra.mxu0 0.0
    %300 = vmatprep.subr.mxu0 0.0
    %301 = vmatpush1.xpose.msra.mxu0 0.0
    %302 = vmatprep.subr.mxu0 0.0
    %303 = vmatpush1.xpose.msra.mxu0 0.0
    %304 = vmatprep.subr.mxu0 0.0
    %305 = vmatpush1.xpose.msra.mxu0 0.0
    %306 = vmatprep.mubr.f32.mxu0 0.0
    %307 = vmatmul.mubr.f32.gmra.mrb[0].mxu0 %v215
    %v308 = vpop.f32.mrb[0].mxu0
    %v309 = vadd.f32 %v65, %v308
    %v310 = vpop.f32.mrb[0].mxu0
    %311 = vmatprep.mubr.f32.mxu0 0.0
    %312 = vmatmul.mubr.f32.gmra.mrb[0].mxu0 %v218
    %v313 = vpop.f32.mrb[0].mxu0
    %v314 = vadd.f32 %v66, %v313
    %v315 = vpop.f32.mrb[0].mxu0
    %316 = vmatprep.mubr.f32.mxu0 0.0
    %317 = vmatmul.mubr.f32.gmra.mrb[0].mxu0 %v221
    %v318 = vpop.f32.mrb[0].mxu0
    %v319 = vadd.f32 %v67, %v318
    %v320 = vpop.f32.mrb[0].mxu0
    %321 = vmatprep.mubr.f32.mxu0 0.0
    %322 = vmatmul.mubr.f32.gmra.mrb[0].mxu0 %v224
    %v323 = vpop.f32.mrb[0].mxu0
    %v324 = vadd.f32 %v68, %v323
    %v325 = vpop.f32.mrb[0].mxu0
    %326 = vmatprep.mubr.f32.mxu0 0.0
    %327 = vmatmul.mubr.f32.gmra.mrb[0].mxu0 %v227
    %v328 = vpop.f32.mrb[0].mxu0
    %v329 = vadd.f32 %v69, %v328
    %v330 = vpop.f32.mrb[0].mxu0
    %331 = vmatprep.mubr.f32.mxu0 0.0
    %332 = vmatmul.mubr.f32.gmra.mrb[0].mxu0 %v230
    %v333 = vpop.f32.mrb[0].mxu0
    %v334 = vadd.f32 %v70, %v333
    %v335 = vpop.f32.mrb[0].mxu0
    %336 = vmatprep.mubr.f32.mxu0 0.0
    %337 = vmatmul.mubr.f32.gmra.mrb[0].mxu0 %v233
    %v338 = vpop.f32.mrb[0].mxu0
    %v339 = vadd.f32 %v71, %v338
    %v340 = vpop.f32.mrb[0].mxu0
    %341 = vmatprep.mubr.f32.mxu0 0.0
    %342 = vmatmul.mubr.f32.gmra.mrb[0].mxu0 %v236
    %v343 = vpop.f32.mrb[0].mxu0
    %v344 = vadd.f32 %v72, %v343
    %v345 = vpop.f32.mrb[0].mxu0
    %346 = vdwg.mxu0
    %vm347 = vcmask 130048
    %v348 = vsel %vm347, %v309, -inf
    %349 = vmax.xlane.f32.xlu0 %v348
    %v350 = vpop.xlane.xlu0 %349
    %v351 = vsel %vm347, %v314, -inf
    %352 = vmax.xlane.f32.xlu0 %v351
    %v353 = vpop.xlane.xlu0 %352
    %v354 = vsel %vm347, %v319, -inf
    %355 = vmax.xlane.f32.xlu0 %v354
    %v356 = vpop.xlane.xlu0 %355
    %v357 = vsel %vm347, %v324, -inf
    %358 = vmax.xlane.f32.xlu0 %v357
    %v359 = vpop.xlane.xlu0 %358
    %v360 = vsel %vm347, %v329, -inf
    %361 = vmax.xlane.f32.xlu0 %v360
    %v362 = vpop.xlane.xlu0 %361
    %v363 = vsel %vm347, %v334, -inf
    %364 = vmax.xlane.f32.xlu0 %v363
    %v365 = vpop.xlane.xlu0 %364
    %v366 = vsel %vm347, %v339, -inf
    %367 = vmax.xlane.f32.xlu0 %v366
    %v368 = vpop.xlane.xlu0 %367
    %v369 = vsel %vm347, %v344, -inf
    %370 = vmax.xlane.f32.xlu0 %v369
    %v371 = vpop.xlane.xlu0 %370
    %v372 = vsub.f32 %v309, %v350
    %v373 = vsub.f32 %v314, %v353
    %v374 = vsub.f32 %v319, %v356
    %v375 = vsub.f32 %v324, %v359
    %v376 = vsub.f32 %v329, %v362
    %v377 = vsub.f32 %v334, %v365
    %v378 = vsub.f32 %v339, %v368
    %v379 = vsub.f32 %v344, %v371
    %v380 = vmul.f32 %v372, 1.442695
    %v381 = vpow.pop %v380
    %v382 = vmul.f32 %v373, 1.442695
    %v383 = vpow.pop %v382
    %v384 = vmul.f32 %v374, 1.442695
    %v385 = vpow.pop %v384
    %v386 = vmul.f32 %v375, 1.442695
    %v387 = vpow.pop %v386
    %v388 = vmul.f32 %v376, 1.442695
    %v389 = vpow.pop %v388
    %v390 = vmul.f32 %v377, 1.442695
    %v391 = vpow.pop %v390
    %v392 = vmul.f32 %v378, 1.442695
    %v393 = vpow.pop %v392
    %v394 = vmul.f32 %v379, 1.442695
    %v395 = vpow.pop %v394
    %v396 = vsel %vm347, %v381, 0.0
    %397 = vadd.xlane.f32.xlu0 %v396
    %v398 = vpop.xlane.xlu0 %397
    %v399 = vsel %vm347, %v383, 0.0
    %400 = vadd.xlane.f32.xlu0 %v399
    %v401 = vpop.xlane.xlu0 %400
    %v402 = vsel %vm347, %v385, 0.0
    %403 = vadd.xlane.f32.xlu0 %v402
    %v404 = vpop.xlane.xlu0 %403
    %v405 = vsel %vm347, %v387, 0.0
    %406 = vadd.xlane.f32.xlu0 %v405
    %v407 = vpop.xlane.xlu0 %406
    %v408 = vsel %vm347, %v389, 0.0
    %409 = vadd.xlane.f32.xlu0 %v408
    %v410 = vpop.xlane.xlu0 %409
    %v411 = vsel %vm347, %v391, 0.0
    %412 = vadd.xlane.f32.xlu0 %v411
    %v413 = vpop.xlane.xlu0 %412
    %v414 = vsel %vm347, %v393, 0.0
    %415 = vadd.xlane.f32.xlu0 %v414
    %v416 = vpop.xlane.xlu0 %415
    %v417 = vsel %vm347, %v395, 0.0
    %418 = vadd.xlane.f32.xlu0 %v417
    %v419 = vpop.xlane.xlu0 %418
    %v420 = vrcp.pop %v398
    %v421 = vrcp.pop %v401
    %v422 = vrcp.pop %v404
    %v423 = vrcp.pop %v407
    %v424 = vrcp.pop %v410
    %v425 = vrcp.pop %v413
    %v426 = vrcp.pop %v416
    %v427 = vrcp.pop %v419
    %430 = vrot.lane.b32.xlu0 %v198, 64
    %v431 = vpop.permute.xlu0 %430
    %432 = vrot.lane.b32.xlu0 %v199, 64
    %v433 = vpop.permute.xlu0 %432
    %v437 = vsel %vm347, %v381, 0
    %v440 = vsel %vm347, %v383, 0
    %v443 = vsel %vm347, %v385, 0
    %v446 = vsel %vm347, %v387, 0
    %v449 = vsel %vm347, %v389, 0
    %v452 = vsel %vm347, %v391, 0
    %v455 = vsel %vm347, %v393, 0
    %v458 = vsel %vm347, %v395, 0
    %460 = vmatprep.subr.mxu0 0.0
    %461 = vmatpush1.msra.mxu0 %v431
    %462 = vmatprep.subr.mxu0 0.0
    %463 = vmatpush1.msra.mxu0 %v433
    %464 = vmatprep.subr.mxu0 0.0
    %465 = vmatpush1.msra.mxu0 0.0
    %466 = vmatprep.subr.mxu0 0.0
    %467 = vmatpush1.msra.mxu0 0.0
    %468 = vmatprep.subr.mxu0 0.0
    %469 = vmatpush1.msra.mxu0 0.0
    %470 = vmatprep.subr.mxu0 0.0
    %471 = vmatpush1.msra.mxu0 0.0
    %472 = vmatprep.subr.mxu0 0.0
    %473 = vmatpush1.msra.mxu0 0.0
    %474 = vmatprep.subr.mxu0 0.0
    %475 = vmatpush1.msra.mxu0 0.0
    %476 = vmatprep.subr.mxu0 0.0
    %477 = vmatpush1.msra.mxu0 0.0
    %478 = vmatprep.subr.mxu0 0.0
    %479 = vmatpush1.msra.mxu0 0.0
    %480 = vmatprep.subr.mxu0 0.0
    %481 = vmatpush1.msra.mxu0 0.0
    %482 = vmatprep.subr.mxu0 0.0
    %483 = vmatpush1.msra.mxu0 0.0
    %484 = vmatprep.subr.mxu0 0.0
    %485 = vmatpush1.msra.mxu0 0.0
    %486 = vmatprep.subr.mxu0 0.0
    %487 = vmatpush1.msra.mxu0 0.0
    %488 = vmatprep.subr.mxu0 0.0
    %489 = vmatpush1.msra.mxu0 0.0
    %490 = vmatprep.subr.mxu0 0.0
    %491 = vmatpush1.msra.mxu0 0.0
    %492 = vmatprep.subr.mxu0 0.0
    %493 = vmatpush1.msra.mxu0 0.0
    %494 = vmatprep.subr.mxu0 0.0
    %495 = vmatpush1.msra.mxu0 0.0
    %496 = vmatprep.subr.mxu0 0.0
    %497 = vmatpush1.msra.mxu0 0.0
    %498 = vmatprep.subr.mxu0 0.0
    %499 = vmatpush1.msra.mxu0 0.0
    %500 = vmatprep.subr.mxu0 0.0
    %501 = vmatpush1.msra.mxu0 0.0
    %502 = vmatprep.subr.mxu0 0.0
    %503 = vmatpush1.msra.mxu0 0.0
    %504 = vmatprep.subr.mxu0 0.0
    %505 = vmatpush1.msra.mxu0 0.0
    %506 = vmatprep.subr.mxu0 0.0
    %507 = vmatpush1.msra.mxu0 0.0
    %508 = vmatprep.subr.mxu0 0.0
    %509 = vmatpush1.msra.mxu0 0.0
    %510 = vmatprep.subr.mxu0 0.0
    %511 = vmatpush1.msra.mxu0 0.0
    %512 = vmatprep.subr.mxu0 0.0
    %513 = vmatpush1.msra.mxu0 0.0
    %514 = vmatprep.subr.mxu0 0.0
    %515 = vmatpush1.msra.mxu0 0.0
    %516 = vmatprep.subr.mxu0 0.0
    %517 = vmatpush1.msra.mxu0 0.0
    %518 = vmatprep.subr.mxu0 0.0
    %519 = vmatpush1.msra.mxu0 0.0
    %520 = vmatprep.subr.mxu0 0.0
    %521 = vmatpush1.msra.mxu0 0.0
    %522 = vmatprep.subr.mxu0 0.0
    %523 = vmatpush1.msra.mxu0 0.0
    %524 = vmatprep.mubr.f32.mxu0 0.0
    %525 = vmatmul.mubr.f32.gmra.mrb[0].mxu0 %v437
    %v526 = vpop.f32.mrb[0].mxu0
    %v527 = vadd.f32 0.0, %v526
    %v528 = vpop.f32.mrb[0].mxu0
    %529 = vmatprep.mubr.f32.mxu0 0.0
    %530 = vmatmul.mubr.f32.gmra.mrb[0].mxu0 %v440
    %v531 = vpop.f32.mrb[0].mxu0
    %v532 = vadd.f32 0.0, %v531
    %v533 = vpop.f32.mrb[0].mxu0
    %534 = vmatprep.mubr.f32.mxu0 0.0
    %535 = vmatmul.mubr.f32.gmra.mrb[0].mxu0 %v443
    %v536 = vpop.f32.mrb[0].mxu0
    %v537 = vadd.f32 0.0, %v536
    %v538 = vpop.f32.mrb[0].mxu0
    %539 = vmatprep.mubr.f32.mxu0 0.0
    %540 = vmatmul.mubr.f32.gmra.mrb[0].mxu0 %v446
    %v541 = vpop.f32.mrb[0].mxu0
    %v542 = vadd.f32 0.0, %v541
    %v543 = vpop.f32.mrb[0].mxu0
    %544 = vmatprep.mubr.f32.mxu0 0.0
    %545 = vmatmul.mubr.f32.gmra.mrb[0].mxu0 %v449
    %v546 = vpop.f32.mrb[0].mxu0
    %v547 = vadd.f32 0.0, %v546
    %v548 = vpop.f32.mrb[0].mxu0
    %549 = vmatprep.mubr.f32.mxu0 0.0
    %550 = vmatmul.mubr.f32.gmra.mrb[0].mxu0 %v452
    %v551 = vpop.f32.mrb[0].mxu0
    %v552 = vadd.f32 0.0, %v551
    %v553 = vpop.f32.mrb[0].mxu0
    %554 = vmatprep.mubr.f32.mxu0 0.0
    %555 = vmatmul.mubr.f32.gmra.mrb[0].mxu0 %v455
    %v556 = vpop.f32.mrb[0].mxu0
    %v557 = vadd.f32 0.0, %v556
    %v558 = vpop.f32.mrb[0].mxu0
    %559 = vmatprep.mubr.f32.mxu0 0.0
    %560 = vmatmul.mubr.f32.gmra.mrb[0].mxu0 %v458
    %v561 = vpop.f32.mrb[0].mxu0
    %v562 = vadd.f32 0.0, %v561
    %v563 = vpop.f32.mrb[0].mxu0
    %564 = vdwg.mxu0
    %v565 = vmul.f32 %v527, %v420
    %v566 = vmul.f32 %v532, %v421
    %v567 = vmul.f32 %v537, %v422
    %v568 = vmul.f32 %v542, %v423
    %v569 = vmul.f32 %v547, %v424
    %v570 = vmul.f32 %v552, %v425
    %v571 = vmul.f32 %v557, %v426
    %v572 = vmul.f32 %v562, %v427
    %v573 = vmul.f32 %v565, %v57
    %v574 = vmul.f32 %v566, %v58
    %v575 = vmul.f32 %v567, %v59
    %v576 = vmul.f32 %v568, %v60
    %v577 = vmul.f32 %v569, %v61
    %v578 = vmul.f32 %v570, %v62
    %v579 = vmul.f32 %v571, %v63
    %v580 = vmul.f32 %v572, %v64
    %v581 = vadd.f32 %v573, %v575
    %v582 = vadd.f32 %v574, %v576
    %v583 = vadd.f32 %v581, %v577
    %v584 = vadd.f32 %v582, %v578
    %v585 = vadd.f32 %v583, %v579
    %v586 = vadd.f32 %v584, %v580
    %v587 = vpack.c.bf16 %v586, %v585
    %v588 = vlaneseq
    %v589 = vshrl.u32 %v588, 7
    %v590 = vsub.s32 6, %v589
    %v591 = vrot.slane %v55, %v590
    %v596 = vunpack.c.l.b16 %v39
    %v597 = vunpack.c.l.b16 %v40
    %v598 = vunpack.c.l.b16 %v41
    %v599 = vunpack.c.l.b16 %v42
    %v600 = vpack.c.b16 %v597, %v596
    %v601 = vpack.c.b16 %v599, %v598
    %v605 = vsel %vm73, %v587, 0
    %607 = vmatprep.subr.bf16.mxu0 0
    %608 = vmatpush1.bf16.msra.mxu0 %v600
    %609 = vmatprep.subr.bf16.mxu0 0
    %610 = vmatpush1.bf16.msra.mxu0 %v601
    %611 = vmatprep.subr.bf16.mxu0 0
    %612 = vmatpush1.bf16.msra.mxu0 0
    %613 = vmatprep.subr.bf16.mxu0 0
    %614 = vmatpush1.bf16.msra.mxu0 0
    %615 = vmatprep.subr.bf16.mxu0 0
    %616 = vmatpush1.bf16.msra.mxu0 0
    %617 = vmatprep.subr.bf16.mxu0 0
    %618 = vmatpush1.bf16.msra.mxu0 0
    %619 = vmatprep.subr.bf16.mxu0 0
    %620 = vmatpush1.bf16.msra.mxu0 0
    %621 = vmatprep.subr.bf16.mxu0 0
    %622 = vmatpush1.bf16.msra.mxu0 0
    %623 = vmatprep.subr.bf16.mxu0 0
    %624 = vmatpush1.bf16.msra.mxu0 0
    %625 = vmatprep.subr.bf16.mxu0 0
    %626 = vmatpush1.bf16.msra.mxu0 0
    %627 = vmatprep.subr.bf16.mxu0 0
    %628 = vmatpush1.bf16.msra.mxu0 0
    %629 = vmatprep.subr.bf16.mxu0 0
    %630 = vmatpush1.bf16.msra.mxu0 0
    %631 = vmatprep.subr.bf16.mxu0 0
    %632 = vmatpush1.bf16.msra.mxu0 0
    %633 = vmatprep.subr.bf16.mxu0 0
    %634 = vmatpush1.bf16.msra.mxu0 0
    %635 = vmatprep.subr.bf16.mxu0 0
    %636 = vmatpush1.bf16.msra.mxu0 0
    %637 = vmatprep.subr.bf16.mxu0 0
    %638 = vmatpush1.bf16.msra.mxu0 0
    %639 = vmatprep.mubr.bf16.mxu0 0
    %640 = vmatmul.mubr.bf16.gmra.mrb[0].mxu0 %v605
    %v641 = vpop.f32.mrb[0].mxu0
    %v642 = vadd.f32 %v591, %v641
    %v643 = vpop.f32.mrb[0].mxu0
    %v644 = vpop.f32.mrb[0].mxu0
    %v645 = vadd.f32 %v591, %v644
    %v646 = vpop.f32.mrb[0].mxu0
    %647 = vdwg.mxu0
    %v648 = vadd.f32 %v31, %v642
    %v649 = vadd.f32 %v32, %v645
    %v650 = vsel %vm73, %v648, 0.0
    %651 = vadd.xlane.f32.xlu0 %v650
    %v652 = vpop.xlane.xlu0 %651
    %v653 = vsel %vm73, %v649, 0.0
    %654 = vadd.xlane.f32.xlu0 %v653
    %v655 = vpop.xlane.xlu0 %654
    %v656 = vmul.f32 %v652, %v80
    %v657 = vmul.f32 %v655, %v80
    %v658 = vsub.f32 %v648, %v656
    %v659 = vsub.f32 %v649, %v657
    %v660 = vmul.f32 %v658, %v658
    %v661 = vmul.f32 %v659, %v659
    %v662 = vsel %vm73, %v660, 0.0
    %663 = vadd.xlane.f32.xlu0 %v662
    %v664 = vpop.xlane.xlu0 %663
    %v665 = vsel %vm73, %v661, 0.0
    %666 = vadd.xlane.f32.xlu0 %v665
    %v667 = vpop.xlane.xlu0 %666
    %v668 = vmul.f32 %v664, %v80
    %v669 = vmul.f32 %v667, %v80
    %v670 = vadd.f32 %v668, 1e-05
    %v671 = vadd.f32 %v669, 1e-05
    %v672 = vrsqrt.pop %v670
    %v673 = vrsqrt.pop %v671
    %v674 = vmul.f32 %v658, %v672
    %v675 = vmul.f32 %v659, %v673
    %v676 = vlaneseq
    %v677 = vshrl.u32 %v676, 7
    %v678 = vsub.s32 2, %v677
    %v679 = vrot.slane %v55, %v678
    %v680 = vmul.f32 %v674, %v679
    %v681 = vmul.f32 %v675, %v679
    %v682 = vlaneseq
    %v683 = vshrl.u32 %v682, 7
    %v684 = vsub.s32 3, %v683
    %v685 = vrot.slane %v55, %v684
    %v686 = vadd.f32 %v680, %v685
    %v687 = vadd.f32 %v681, %v685
    %v688 = vpack.c.bf16 %v687, %v686
    %v689 = vlaneseq
    %v690 = vshrl.u32 %v689, 7
    %v691 = vsub.s32 7, %v690
    %v692 = vrot.slane %v55, %v691
    %v697 = vunpack.c.l.b16 %v43
    %v698 = vunpack.c.l.b16 %v44
    %v699 = vunpack.c.l.b16 %v45
    %v700 = vunpack.c.l.b16 %v46
    %v701 = vpack.c.b16 %v698, %v697
    %v702 = vpack.c.b16 %v700, %v699
    %v706 = vsel %vm73, %v688, 0
    %708 = vmatprep.subr.bf16.mxu0 0
    %709 = vmatpush1.bf16.msra.mxu0 %v701
    %710 = vmatprep.subr.bf16.mxu0 0
    %711 = vmatpush1.bf16.msra.mxu0 %v702
    %712 = vmatprep.subr.bf16.mxu0 0
    %713 = vmatpush1.bf16.msra.mxu0 0
    %714 = vmatprep.subr.bf16.mxu0 0
    %715 = vmatpush1.bf16.msra.mxu0 0
    %716 = vmatprep.subr.bf16.mxu0 0
    %717 = vmatpush1.bf16.msra.mxu0 0
    %718 = vmatprep.subr.bf16.mxu0 0
    %719 = vmatpush1.bf16.msra.mxu0 0
    %720 = vmatprep.subr.bf16.mxu0 0
    %721 = vmatpush1.bf16.msra.mxu0 0
    %722 = vmatprep.subr.bf16.mxu0 0
    %723 = vmatpush1.bf16.msra.mxu0 0
    %724 = vmatprep.subr.bf16.mxu0 0
    %725 = vmatpush1.bf16.msra.mxu0 0
    %726 = vmatprep.subr.bf16.mxu0 0
    %727 = vmatpush1.bf16.msra.mxu0 0
    %728 = vmatprep.subr.bf16.mxu0 0
    %729 = vmatpush1.bf16.msra.mxu0 0
    %730 = vmatprep.subr.bf16.mxu0 0
    %731 = vmatpush1.bf16.msra.mxu0 0
    %732 = vmatprep.subr.bf16.mxu0 0
    %733 = vmatpush1.bf16.msra.mxu0 0
    %734 = vmatprep.subr.bf16.mxu0 0
    %735 = vmatpush1.bf16.msra.mxu0 0
    %736 = vmatprep.subr.bf16.mxu0 0
    %737 = vmatpush1.bf16.msra.mxu0 0
    %738 = vmatprep.subr.bf16.mxu0 0
    %739 = vmatpush1.bf16.msra.mxu0 0
    %740 = vmatprep.mubr.bf16.mxu0 0
    %741 = vmatmul.mubr.bf16.gmra.mrb[0].mxu0 %v706
    %v742 = vpop.f32.mrb[0].mxu0
    %v743 = vadd.f32 %v692, %v742
    %v744 = vpop.f32.mrb[0].mxu0
    %v745 = vpop.f32.mrb[0].mxu0
    %v746 = vadd.f32 %v692, %v745
    %v747 = vpop.f32.mrb[0].mxu0
    %748 = vdwg.mxu0
    %v749 = vmax.f32 %v743, 0.0
    %v750 = vmax.f32 %v746, 0.0
    %v751 = vpack.c.bf16 %v750, %v749
    %v752 = vlaneseq
    %v753 = vshrl.u32 %v752, 7
    %v754 = vsub.s32 0, %v753
    %v755 = vrot.slane %v56, %v754
    %v764 = vunpack.c.l.b16 %v47
    %v765 = vunpack.c.l.b16 %v48
    %v766 = vunpack.c.l.b16 %v49
    %v767 = vunpack.c.l.b16 %v50
    %v768 = vunpack.c.l.b16 %v51
    %v769 = vunpack.c.l.b16 %v52
    %v770 = vunpack.c.l.b16 %v53
    %v771 = vunpack.c.l.b16 %v54
    %v772 = vpack.c.b16 %v765, %v764
    %v773 = vpack.c.b16 %v767, %v766
    %v774 = vpack.c.b16 %v769, %v768
    %v775 = vpack.c.b16 %v771, %v770
    %vm780 = vcmask 523264
    %v782 = vsel %vm780, %v751, 0
    %784 = vmatprep.subr.bf16.mxu0 0
    %785 = vmatpush1.bf16.msra.mxu0 %v772
    %786 = vmatprep.subr.bf16.mxu0 0
    %787 = vmatpush1.bf16.msra.mxu0 %v773
    %788 = vmatprep.subr.bf16.mxu0 0
    %789 = vmatpush1.bf16.msra.mxu0 %v774
    %790 = vmatprep.subr.bf16.mxu0 0
    %791 = vmatpush1.bf16.msra.mxu0 %v775
    %792 = vmatprep.subr.bf16.mxu0 0
    %793 = vmatpush1.bf16.msra.mxu0 0
    %794 = vmatprep.subr.bf16.mxu0 0
    %795 = vmatpush1.bf16.msra.mxu0 0
    %796 = vmatprep.subr.bf16.mxu0 0
    %797 = vmatpush1.bf16.msra.mxu0 0
    %798 = vmatprep.subr.bf16.mxu0 0
    %799 = vmatpush1.bf16.msra.mxu0 0
    %800 = vmatprep.subr.bf16.mxu0 0
    %801 = vmatpush1.bf16.msra.mxu0 0
    %802 = vmatprep.subr.bf16.mxu0 0
    %803 = vmatpush1.bf16.msra.mxu0 0
    %804 = vmatprep.subr.bf16.mxu0 0
    %805 = vmatpush1.bf16.msra.mxu0 0
    %806 = vmatprep.subr.bf16.mxu0 0
    %807 = vmatpush1.bf16.msra.mxu0 0
    %808 = vmatprep.subr.bf16.mxu0 0
    %809 = vmatpush1.bf16.msra.mxu0 0
    %810 = vmatprep.subr.bf16.mxu0 0
    %811 = vmatpush1.bf16.msra.mxu0 0
    %812 = vmatprep.subr.bf16.mxu0 0
    %813 = vmatpush1.bf16.msra.mxu0 0
    %814 = vmatprep.subr.bf16.mxu0 0
    %815 = vmatpush1.bf16.msra.mxu0 0
    %816 = vmatprep.mubr.bf16.mxu0 0
    %817 = vmatmul.mubr.bf16.gmra.mrb[0].mxu0 %v782
    %v818 = vpop.f32.mrb[0].mxu0
    %v819 = vadd.f32 %v755, %v818
    %v820 = vpop.f32.mrb[0].mxu0
    %v821 = vpop.f32.mrb[0].mxu0
    %v822 = vadd.f32 %v755, %v821
    %v823 = vpop.f32.mrb[0].mxu0
    %824 = vdwg.mxu0
    %v825 = vadd.f32 %v648, %v819
    %v826 = vadd.f32 %v649, %v822
    %827 = vst.msk [vmem:[#allocation2] sm:$0xff] %vm73, %v825
    %828 = vst.msk [vmem:[#allocation2 + $0x8] sm:$0xff] %vm73, %v826
    // Predicated region
    $region34: #{prenorm_global_decoder_layer.1} parent=1 // pred_check
      _
    $region35: #{prenorm_global_decoder_layer.1} parent=1 // pred_check_branch
      %830 = sbr.rel (0) target = $region37
    $region36: #{prenorm_global_decoder_layer.1} parent=1 // pred_region
      %s832 = ssub.s32 256, 256
      %833 = vsyncadd [#allocation3], %s832
      %s834 = sshll.u32 [#allocation2], 4
      %s835 = int_to_ptr.vmem [resolvable:$true] %s834
      %840 = dma.vmem_to_hbm [thread:$0]  %s835, 256, %s8, [#allocation3], 128, 128, 8
    $region37: #{prenorm_global_decoder_layer.1} parent=1 // pred_fallthru
      _
    // Predicated region
    $region38: #{prenorm_global_decoder_layer.1} parent=1 // pred_check
      _
    $region39: #{prenorm_global_decoder_layer.1} parent=1 // pred_check_branch
      %842 = sbr.rel (0) target = $region41
    $region40: #{prenorm_global_decoder_layer.1} parent=1 // pred_region
      %843 = dma.done [#allocation3], 256
    $region41: #{prenorm_global_decoder_layer.1} parent=1 // pred_fallthru
      _
    %844 = vsyncpa [#allocation3], 1

</llo_original>
